<compile_context>
chip_gen: v6e
topology: v6e:2x2x1
jax: 0.10.0
libtpu: 0.0.40
codegen_flags: <defaults>
</compile_context>

<pallas_src>
import functools
import math

import jax
import jax.numpy as jnp
from jax.experimental import pallas as pl
from jax.experimental.pallas import tpu as pltpu


def _round_up(v, m):
    return ((v + m - 1) // m) * m


def _fused_mlp_kernel(x_ref, *rest, n_layers, compute_dtype):
    """rest = (w_0, b_0, ..., w_{L-1}, b_{L-1}, alpha_ref, o_ref)."""
    wb_refs = rest[: 2 * n_layers]
    alpha_ref = rest[2 * n_layers]
    o_ref = rest[2 * n_layers + 1]

    alpha = alpha_ref[0]                          # shared PReLU scalar, read from SMEM once
    a = x_ref[...].astype(jnp.float32)            # activation stays a local value (no scratch)
    for layer in range(n_layers):                 # static unroll: n_layers is small
        w_ref = wb_refs[2 * layer]
        b_ref = wb_refs[2 * layer + 1]
        y = jnp.dot(a.astype(compute_dtype), w_ref[...],   # MXU, f32 accumulation
                    preferred_element_type=jnp.float32)
        y = y + b_ref[...]                        # (1, n_pad) bias broadcast, f32 epilogue
        if layer < n_layers - 1:
            y = jnp.where(y >= 0.0, y, alpha * y)  # PReLU on the VPU, f32
            # dropout: identity at inference
        a = y
    o_ref[...] = a.astype(o_ref.dtype)            # single lane-dense store per tile


def pack_feedforward_params(params, *, compute_dtype=jnp.float32):
    """Pad each layer's (w_t [K,N], b [N]) to lane-dense 128-multiples ONCE, up front.

    Zero padding keeps padded columns exactly zero through every layer, so slicing the final
    output is exact. Weights are stored in `compute_dtype` (bf16 halves weight DMA/VMEM on all
    generations); biases stay f32 for the f32 epilogue.
    """
    packed = []
    for (w_t, b) in params:
        k, n = w_t.shape
        kp, npad = _round_up(k, 128), _round_up(n, 128)
        w_pad = jnp.zeros((kp, npad), jnp.float32).at[:k, :n].set(w_t.astype(jnp.float32))
        b_pad = jnp.zeros((1, npad), jnp.float32).at[0, :n].set(
            jnp.asarray(b, jnp.float32).reshape(-1))
        packed.append((w_pad.astype(compute_dtype), b_pad))
    return packed


def _choose_tile_m(m, tm):
    m8 = _round_up(m, 8)
    tile_m = min(tm, m8)
    # v7x has 2 TensorCores: ensure >= 2 grid steps when the batch allows so the "parallel"
    # grid axis can actually shard across them (harmless on 1-TC v5e/v6e).
    if m8 // tile_m < 2 and m8 >= 16:
        tile_m = _round_up((m8 + 1) // 2, 8)
    m_pad = _round_up(m, tile_m)
    return tile_m, m_pad


def feedforward_forward(x, packed_params, alpha, *, out_feats,
                        compute_dtype=jnp.float32, tm=256):
    """Fused FeedForwardNet forward (inference).

    x: [M, in_feats] f32. packed_params: output of pack_feedforward_params (per-layer padded).
    Returns [M, out_feats] in x.dtype.
    """
    n_layers = len(packed_params)
    M, in_feats = x.shape
    in_pad = packed_params[0][0].shape[0]
    out_pad = packed_params[-1][0].shape[1]
    assert in_feats <= in_pad and out_feats <= out_pad

    tile_m, m_pad = _choose_tile_m(M, tm)
    x_pad = jnp.zeros((m_pad, in_pad), x.dtype).at[:M, :in_feats].set(x)

    wb_flat = [t for wb in packed_params for t in wb]   # (w0, b0, w1, b1, ...)

    # VMEM budget: single-buffered weights/biases + double-buffered activation I/O tiles.
    itemsize = jnp.dtype(x.dtype).itemsize
    weight_bytes = sum(int(a.size) * a.dtype.itemsize for a in wb_flat)
    io_bytes = 2 * tile_m * (in_pad + out_pad) * itemsize
    needed = weight_bytes + io_bytes
    vmem_limit_bytes = int(min(64 << 20, max(32 << 20, 2 * needed + (8 << 20))))

    # Advisory cost estimate for XLA scheduling around the custom call.
    flops = 2 * m_pad * sum(int(w.shape[0]) * int(w.shape[1]) for w, _ in packed_params)
    bytes_accessed = int(x_pad.size) * itemsize + weight_bytes + m_pad * out_pad * itemsize
    cost = pl.CostEstimate(flops=flops, transcendentals=0, bytes_accessed=bytes_accessed)

    kernel = functools.partial(_fused_mlp_kernel, n_layers=n_layers,
                               compute_dtype=compute_dtype)

    def run(single_buffer_weights):
        wb_mode = pl.Buffered(1) if single_buffer_weights else None
        in_specs = [pl.BlockSpec((tile_m, in_pad), lambda i: (i, 0))]       # activation tile
        for w_pad, b_pad in packed_params:
            # Grid-invariant (constant index_map) -> single resident buffer is enough.
            in_specs.append(pl.BlockSpec(w_pad.shape, lambda i: (0, 0),
                                         pipeline_mode=wb_mode))
            in_specs.append(pl.BlockSpec(b_pad.shape, lambda i: (0, 0),
                                         pipeline_mode=wb_mode))
        in_specs.append(pl.BlockSpec(memory_space=pltpu.SMEM))              # PReLU alpha scalar

        return pl.pallas_call(
            kernel,
            out_shape=jax.ShapeDtypeStruct((m_pad, out_pad), x.dtype),
            grid=(m_pad // tile_m,),
            in_specs=in_specs,
            out_specs=pl.BlockSpec((tile_m, out_pad), lambda i: (i, 0)),    # lane-dense output
            compiler_params=pltpu.CompilerParams(
                dimension_semantics=("parallel",),       # batch tiles independent -> 2 TCs on v7x
                vmem_limit_bytes=vmem_limit_bytes,
            ),
            cost_estimate=cost,
        )(x_pad, *wb_flat, alpha)

    try:
        out = run(True)
    except Exception:
        # Fallback for JAX/Mosaic builds that reject pipeline_mode=pl.Buffered(1) on the main
        # pallas_call pipeline; weights then just use the default double-buffering.
        out = run(False)

    return out[:M, :out_feats]


def init_feedforward_params(key, in_feats, hidden, out_feats, n_layers):
    """Deterministic init matching FeedForwardNet.reset_parameters():
    xavier_uniform_(W, gain=calculate_gain('relu')), zero bias, PReLU alpha=0.25."""
    gain = math.sqrt(2.0)  # nn.init.calculate_gain('relu')
    if n_layers == 1:
        dims = [(in_feats, out_feats)]
    else:
        dims = [(in_feats, hidden)]
        dims += [(hidden, hidden)] * (n_layers - 2)
        dims += [(hidden, out_feats)]

    params = []
    for (fan_in, fan_out) in dims:
        key, sub = jax.random.split(key)
        bound = gain * math.sqrt(6.0 / (fan_in + fan_out))
        # PyTorch weight is [out, in]; we store the transpose [in, out].
        w = jax.random.uniform(sub, (fan_out, fan_in), jnp.float32, -bound, bound)
        params.append((w.T, jnp.zeros((fan_out,), jnp.float32)))
    alpha = jnp.array([0.25], dtype=jnp.float32)  # nn.PReLU default
    return params, alpha


def feedforward_reference(x, params, alpha, n_layers):
    """Pure-JAX f32 reference for correctness checking (dropout = identity, eval mode)."""
    for layer_id, (w_t, b) in enumerate(params):
        x = x @ w_t + b.reshape(1, -1)
        if layer_id < n_layers - 1:
            x = jnp.where(x >= 0.0, x, alpha[0] * x)
    return x


if __name__ == "__main__":
    in_feats, hidden, out_feats, n_layers = 16, 32, 4, 3

    key = jax.random.PRNGKey(0)
    key, xk1, xk2 = jax.random.split(key, 3)
    params, alpha = init_feedforward_params(key, in_feats, hidden, out_feats, n_layers)

    # Pack/pad the weights ONCE (hoisted out of the per-call wrapper).
    packed_f32 = pack_feedforward_params(params, compute_dtype=jnp.float32)

    # Small batch: single tile, f32 path -> tight check.
    x_small = jax.random.normal(xk1, (8, in_feats), dtype=jnp.float32)
    out_small = jax.block_until_ready(
        feedforward_forward(x_small, packed_f32, alpha, out_feats=out_feats))
    ref_small = feedforward_reference(x_small, params, alpha, n_layers)
    assert out_small.shape == (8, out_feats)
    assert jnp.allclose(out_small, ref_small, atol=1e-5, rtol=1e-5), \
        "Pallas f32 output mismatch vs reference (small batch)"

    # Larger batch: 2-step "parallel" grid exercises pipelining + v7x megacore split.
    x_big = jax.random.normal(xk2, (512, in_feats), dtype=jnp.float32)
    ref_big = feedforward_reference(x_big, params, alpha, n_layers)
    out_f32 = jax.block_until_ready(
        feedforward_forward(x_big, packed_f32, alpha, out_feats=out_feats, tm=256))
    assert out_f32.shape == (512, out_feats)
    assert jnp.allclose(out_f32, ref_big, atol=1e-5, rtol=1e-5), \
        "Pallas f32 output mismatch vs reference (batched grid)"

    # bf16 weights / matmul inputs, f32 accumulation + epilogue -> loose check.
    packed_bf16 = pack_feedforward_params(params, compute_dtype=jnp.bfloat16)
    out_bf16 = jax.block_until_ready(
        feedforward_forward(x_big, packed_bf16, alpha, out_feats=out_feats, tm=256,
                            compute_dtype=jnp.bfloat16))
    assert jnp.allclose(out_bf16, ref_big, atol=5e-2, rtol=5e-2), \
        "Pallas bf16 output mismatch vs reference"

    print("KERNEL_OK")
</pallas_src>

<mosaic_0001>
module attributes {stable_mosaic.version = 11 : i64} {
  func.func @_fused_mlp_kernel(%arg0: i32, %arg1: memref<8x128xf32, #tpu.memory_space<vmem>>, %arg2: memref<128x128xf32, #tpu.memory_space<vmem>>, %arg3: memref<1x128xf32, #tpu.memory_space<vmem>>, %arg4: memref<128x128xf32, #tpu.memory_space<vmem>>, %arg5: memref<1x128xf32, #tpu.memory_space<vmem>>, %arg6: memref<128x128xf32, #tpu.memory_space<vmem>>, %arg7: memref<1x128xf32, #tpu.memory_space<vmem>>, %arg8: memref<1xf32, #tpu.memory_space<smem>>, %arg9: memref<8x128xf32, #tpu.memory_space<vmem>>) attributes {dimension_semantics = [#tpu.dimension_semantics<parallel>], iteration_bounds = array<i64: 1>, scalar_prefetch = 0 : i64, scratch_operands = 0 : i64, tpu.core_type = #tpu.core_type<tc>, window_params = [{transform_indices = @transform_0, window_bounds = array<i64: 8, 128>}, {pipeline_mode = #tpu.pipeline_mode<synchronous>, transform_indices = @transform_1, window_bounds = array<i64: 128, 128>}, {pipeline_mode = #tpu.pipeline_mode<synchronous>, transform_indices = @transform_2, window_bounds = array<i64: 1, 128>}, {pipeline_mode = #tpu.pipeline_mode<synchronous>, transform_indices = @transform_3, window_bounds = array<i64: 128, 128>}, {pipeline_mode = #tpu.pipeline_mode<synchronous>, transform_indices = @transform_4, window_bounds = array<i64: 1, 128>}, {pipeline_mode = #tpu.pipeline_mode<synchronous>, transform_indices = @transform_5, window_bounds = array<i64: 128, 128>}, {pipeline_mode = #tpu.pipeline_mode<synchronous>, transform_indices = @transform_6, window_bounds = array<i64: 1, 128>}, {transform_indices = @transform_7, window_bounds = array<i64: 1>}, {transform_indices = @transform_8, window_bounds = array<i64: 8, 128>}]} {
    %c0 = arith.constant 0 : index
    %0 = memref.load %arg8[%c0] : memref<1xf32, #tpu.memory_space<smem>>
    %c0_0 = arith.constant 0 : index
    %c0_1 = arith.constant 0 : index
    %1 = vector.load %arg1[%c0_0, %c0_1] : memref<8x128xf32, #tpu.memory_space<vmem>>, vector<8x128xf32>
    %c0_2 = arith.constant 0 : index
    %c0_3 = arith.constant 0 : index
    %2 = vector.load %arg2[%c0_2, %c0_3] : memref<128x128xf32, #tpu.memory_space<vmem>>, vector<128x128xf32>
    %cst = arith.constant dense<0.000000e+00> : vector<8x128xf32>
    %3 = tpu.matmul %1, %2, %cst {dimension_numbers = #tpu.dot_dimension_numbers<[1], [0], [0], [1], [0, 0, 1, 1], [], []>} : vector<8x128xf32>, vector<128x128xf32>, vector<8x128xf32> -> vector<8x128xf32>
    %c0_4 = arith.constant 0 : index
    %c0_5 = arith.constant 0 : index
    %4 = vector.load %arg3[%c0_4, %c0_5] : memref<1x128xf32, #tpu.memory_space<vmem>>, vector<1x128xf32>
    %5 = vector.broadcast %4 : vector<1x128xf32> to vector<8x128xf32>
    %6 = arith.addf %3, %5 : vector<8x128xf32>
    %cst_6 = arith.constant 0.000000e+00 : f32
    %7 = vector.broadcast %cst_6 : f32 to vector<8x128xf32>
    %8 = arith.cmpf oge, %6, %7 : vector<8x128xf32>
    %9 = vector.broadcast %0 : f32 to vector<8x128xf32>
    %10 = arith.mulf %9, %6 : vector<8x128xf32>
    %11 = arith.select %8, %6, %10 : vector<8x128xi1>, vector<8x128xf32>
    %c0_7 = arith.constant 0 : index
    %c0_8 = arith.constant 0 : index
    %12 = vector.load %arg4[%c0_7, %c0_8] : memref<128x128xf32, #tpu.memory_space<vmem>>, vector<128x128xf32>
    %cst_9 = arith.constant dense<0.000000e+00> : vector<8x128xf32>
    %13 = tpu.matmul %11, %12, %cst_9 {dimension_numbers = #tpu.dot_dimension_numbers<[1], [0], [0], [1], [0, 0, 1, 1], [], []>} : vector<8x128xf32>, vector<128x128xf32>, vector<8x128xf32> -> vector<8x128xf32>
    %c0_10 = arith.constant 0 : index
    %c0_11 = arith.constant 0 : index
    %14 = vector.load %arg5[%c0_10, %c0_11] : memref<1x128xf32, #tpu.memory_space<vmem>>, vector<1x128xf32>
    %15 = vector.broadcast %14 : vector<1x128xf32> to vector<8x128xf32>
    %16 = arith.addf %13, %15 : vector<8x128xf32>
    %cst_12 = arith.constant 0.000000e+00 : f32
    %17 = vector.broadcast %cst_12 : f32 to vector<8x128xf32>
    %18 = arith.cmpf oge, %16, %17 : vector<8x128xf32>
    %19 = vector.broadcast %0 : f32 to vector<8x128xf32>
    %20 = arith.mulf %19, %16 : vector<8x128xf32>
    %21 = arith.select %18, %16, %20 : vector<8x128xi1>, vector<8x128xf32>
    %c0_13 = arith.constant 0 : index
    %c0_14 = arith.constant 0 : index
    %22 = vector.load %arg6[%c0_13, %c0_14] : memref<128x128xf32, #tpu.memory_space<vmem>>, vector<128x128xf32>
    %cst_15 = arith.constant dense<0.000000e+00> : vector<8x128xf32>
    %23 = tpu.matmul %21, %22, %cst_15 {dimension_numbers = #tpu.dot_dimension_numbers<[1], [0], [0], [1], [0, 0, 1, 1], [], []>} : vector<8x128xf32>, vector<128x128xf32>, vector<8x128xf32> -> vector<8x128xf32>
    %c0_16 = arith.constant 0 : index
    %c0_17 = arith.constant 0 : index
    %24 = vector.load %arg7[%c0_16, %c0_17] : memref<1x128xf32, #tpu.memory_space<vmem>>, vector<1x128xf32>
    %25 = vector.broadcast %24 : vector<1x128xf32> to vector<8x128xf32>
    %26 = arith.addf %23, %25 : vector<8x128xf32>
    %c0_18 = arith.constant 0 : index
    %c0_19 = arith.constant 0 : index
    %27 = vector.load %arg9[%c0_18, %c0_19] : memref<8x128xf32, #tpu.memory_space<vmem>>, vector<8x128xf32>
    tpu.vector_store %arg9[%c0_18, %c0_19], %26 {strides = array<i32>} : memref<8x128xf32, #tpu.memory_space<vmem>>, vector<8x128xf32>,
    return
  }
  func.func @transform_0(%arg0: i32) -> (i32, i32) {
    %c0_i32 = arith.constant 0 : i32
    %c0_i32_0 = arith.constant 0 : i32
    return %arg0, %c0_i32 : i32, i32
  }
  func.func @transform_1(%arg0: i32) -> (i32, i32) {
    %c0_i32 = arith.constant 0 : i32
    %c0_i32_0 = arith.constant 0 : i32
    %c0_i32_1 = arith.constant 0 : i32
    return %c0_i32, %c0_i32_0 : i32, i32
  }
  func.func @transform_2(%arg0: i32) -> (i32, i32) {
    %c0_i32 = arith.constant 0 : i32
    %c0_i32_0 = arith.constant 0 : i32
    %c0_i32_1 = arith.constant 0 : i32
    return %c0_i32, %c0_i32_0 : i32, i32
  }
  func.func @transform_3(%arg0: i32) -> (i32, i32) {
    %c0_i32 = arith.constant 0 : i32
    %c0_i32_0 = arith.constant 0 : i32
    %c0_i32_1 = arith.constant 0 : i32
    return %c0_i32, %c0_i32_0 : i32, i32
  }
  func.func @transform_4(%arg0: i32) -> (i32, i32) {
    %c0_i32 = arith.constant 0 : i32
    %c0_i32_0 = arith.constant 0 : i32
    %c0_i32_1 = arith.constant 0 : i32
    return %c0_i32, %c0_i32_0 : i32, i32
  }
  func.func @transform_5(%arg0: i32) -> (i32, i32) {
    %c0_i32 = arith.constant 0 : i32
    %c0_i32_0 = arith.constant 0 : i32
    %c0_i32_1 = arith.constant 0 : i32
    return %c0_i32, %c0_i32_0 : i32, i32
  }
  func.func @transform_6(%arg0: i32) -> (i32, i32) {
    %c0_i32 = arith.constant 0 : i32
    %c0_i32_0 = arith.constant 0 : i32
    %c0_i32_1 = arith.constant 0 : i32
    return %c0_i32, %c0_i32_0 : i32, i32
  }
  func.func @transform_7(%arg0: i32) -> i32 {
    %c0_i32 = arith.constant 0 : i32
    %c0_i32_0 = arith.constant 0 : i32
    return %c0_i32 : i32
  }
  func.func @transform_8(%arg0: i32) -> (i32, i32) {
    %c0_i32 = arith.constant 0 : i32
    %c0_i32_0 = arith.constant 0 : i32
    return %arg0, %c0_i32 : i32, i32
  }
}

module attributes {stable_mosaic.version = 11 : i64} {
  func.func @_fused_mlp_kernel(%arg0: i32, %arg1: memref<8x128xf32, #tpu.memory_space<vmem>>, %arg2: memref<128x128xf32, #tpu.memory_space<vmem>>, %arg3: memref<1x128xf32, #tpu.memory_space<vmem>>, %arg4: memref<128x128xf32, #tpu.memory_space<vmem>>, %arg5: memref<1x128xf32, #tpu.memory_space<vmem>>, %arg6: memref<128x128xf32, #tpu.memory_space<vmem>>, %arg7: memref<1x128xf32, #tpu.memory_space<vmem>>, %arg8: memref<1xf32, #tpu.memory_space<smem>>, %arg9: memref<8x128xf32, #tpu.memory_space<vmem>>) attributes {dimension_semantics = [#tpu.dimension_semantics<parallel>], iteration_bounds = array<i64: 1>, scalar_prefetch = 0 : i64, scratch_operands = 0 : i64, tpu.core_type = #tpu.core_type<tc>, window_params = [{transform_indices = @transform_0, window_bounds = array<i64: 8, 128>}, {pipeline_mode = #tpu.pipeline_mode<synchronous>, transform_indices = @transform_1, window_bounds = array<i64: 128, 128>}, {pipeline_mode = #tpu.pipeline_mode<synchronous>, transform_indices = @transform_2, window_bounds = array<i64: 1, 128>}, {pipeline_mode = #tpu.pipeline_mode<synchronous>, transform_indices = @transform_3, window_bounds = array<i64: 128, 128>}, {pipeline_mode = #tpu.pipeline_mode<synchronous>, transform_indices = @transform_4, window_bounds = array<i64: 1, 128>}, {pipeline_mode = #tpu.pipeline_mode<synchronous>, transform_indices = @transform_5, window_bounds = array<i64: 128, 128>}, {pipeline_mode = #tpu.pipeline_mode<synchronous>, transform_indices = @transform_6, window_bounds = array<i64: 1, 128>}, {transform_indices = @transform_7, window_bounds = array<i64: 1>}, {transform_indices = @transform_8, window_bounds = array<i64: 8, 128>}]} {
    %c0 = arith.constant 0 : index
    %0 = memref.load %arg8[%c0] : memref<1xf32, #tpu.memory_space<smem>>
    %c0_0 = arith.constant 0 : index
    %c0_1 = arith.constant 0 : index
    %1 = vector.load %arg1[%c0_0, %c0_1] : memref<8x128xf32, #tpu.memory_space<vmem>>, vector<8x128xf32>
    %c0_2 = arith.constant 0 : index
    %c0_3 = arith.constant 0 : index
    %2 = vector.load %arg2[%c0_2, %c0_3] : memref<128x128xf32, #tpu.memory_space<vmem>>, vector<128x128xf32>
    %cst = arith.constant dense<0.000000e+00> : vector<8x128xf32>
    %3 = tpu.matmul %1, %2, %cst {dimension_numbers = #tpu.dot_dimension_numbers<[1], [0], [0], [1], [0, 0, 1, 1], [], []>} : vector<8x128xf32>, vector<128x128xf32>, vector<8x128xf32> -> vector<8x128xf32>
    %c0_4 = arith.constant 0 : index
    %c0_5 = arith.constant 0 : index
    %4 = vector.load %arg3[%c0_4, %c0_5] : memref<1x128xf32, #tpu.memory_space<vmem>>, vector<1x128xf32>
    %5 = vector.broadcast %4 : vector<1x128xf32> to vector<8x128xf32>
    %6 = arith.addf %3, %5 : vector<8x128xf32>
    %cst_6 = arith.constant 0.000000e+00 : f32
    %7 = vector.broadcast %cst_6 : f32 to vector<8x128xf32>
    %8 = arith.cmpf oge, %6, %7 : vector<8x128xf32>
    %9 = vector.broadcast %0 : f32 to vector<8x128xf32>
    %10 = arith.mulf %9, %6 : vector<8x128xf32>
    %11 = arith.select %8, %6, %10 : vector<8x128xi1>, vector<8x128xf32>
    %c0_7 = arith.constant 0 : index
    %c0_8 = arith.constant 0 : index
    %12 = vector.load %arg4[%c0_7, %c0_8] : memref<128x128xf32, #tpu.memory_space<vmem>>, vector<128x128xf32>
    %cst_9 = arith.constant dense<0.000000e+00> : vector<8x128xf32>
    %13 = tpu.matmul %11, %12, %cst_9 {dimension_numbers = #tpu.dot_dimension_numbers<[1], [0], [0], [1], [0, 0, 1, 1], [], []>} : vector<8x128xf32>, vector<128x128xf32>, vector<8x128xf32> -> vector<8x128xf32>
    %c0_10 = arith.constant 0 : index
    %c0_11 = arith.constant 0 : index
    %14 = vector.load %arg5[%c0_10, %c0_11] : memref<1x128xf32, #tpu.memory_space<vmem>>, vector<1x128xf32>
    %15 = vector.broadcast %14 : vector<1x128xf32> to vector<8x128xf32>
    %16 = arith.addf %13, %15 : vector<8x128xf32>
    %cst_12 = arith.constant 0.000000e+00 : f32
    %17 = vector.broadcast %cst_12 : f32 to vector<8x128xf32>
    %18 = arith.cmpf oge, %16, %17 : vector<8x128xf32>
    %19 = vector.broadcast %0 : f32 to vector<8x128xf32>
    %20 = arith.mulf %19, %16 : vector<8x128xf32>
    %21 = arith.select %18, %16, %20 : vector<8x128xi1>, vector<8x128xf32>
    %c0_13 = arith.constant 0 : index
    %c0_14 = arith.constant 0 : index
    %22 = vector.load %arg6[%c0_13, %c0_14] : memref<128x128xf32, #tpu.memory_space<vmem>>, vector<128x128xf32>
    %cst_15 = arith.constant dense<0.000000e+00> : vector<8x128xf32>
    %23 = tpu.matmul %21, %22, %cst_15 {dimension_numbers = #tpu.dot_dimension_numbers<[1], [0], [0], [1], [0, 0, 1, 1], [], []>} : vector<8x128xf32>, vector<128x128xf32>, vector<8x128xf32> -> vector<8x128xf32>
    %c0_16 = arith.constant 0 : index
    %c0_17 = arith.constant 0 : index
    %24 = vector.load %arg7[%c0_16, %c0_17] : memref<1x128xf32, #tpu.memory_space<vmem>>, vector<1x128xf32>
    %25 = vector.broadcast %24 : vector<1x128xf32> to vector<8x128xf32>
    %26 = arith.addf %23, %25 : vector<8x128xf32>
    %c0_18 = arith.constant 0 : index
    %c0_19 = arith.constant 0 : index
    %27 = vector.load %arg9[%c0_18, %c0_19] : memref<8x128xf32, #tpu.memory_space<vmem>>, vector<8x128xf32>
    tpu.vector_store %arg9[%c0_18, %c0_19], %26 {strides = array<i32>} : memref<8x128xf32, #tpu.memory_space<vmem>>, vector<8x128xf32>,
    return
  }
  func.func @transform_0(%arg0: i32) -> (i32, i32) {
    %c0_i32 = arith.constant 0 : i32
    %c0_i32_0 = arith.constant 0 : i32
    return %arg0, %c0_i32 : i32, i32
  }
  func.func @transform_1(%arg0: i32) -> (i32, i32) {
    %c0_i32 = arith.constant 0 : i32
    %c0_i32_0 = arith.constant 0 : i32
    %c0_i32_1 = arith.constant 0 : i32
    return %c0_i32, %c0_i32_0 : i32, i32
  }
  func.func @transform_2(%arg0: i32) -> (i32, i32) {
    %c0_i32 = arith.constant 0 : i32
    %c0_i32_0 = arith.constant 0 : i32
    %c0_i32_1 = arith.constant 0 : i32
    return %c0_i32, %c0_i32_0 : i32, i32
  }
  func.func @transform_3(%arg0: i32) -> (i32, i32) {
    %c0_i32 = arith.constant 0 : i32
    %c0_i32_0 = arith.constant 0 : i32
    %c0_i32_1 = arith.constant 0 : i32
    return %c0_i32, %c0_i32_0 : i32, i32
  }
  func.func @transform_4(%arg0: i32) -> (i32, i32) {
    %c0_i32 = arith.constant 0 : i32
    %c0_i32_0 = arith.constant 0 : i32
    %c0_i32_1 = arith.constant 0 : i32
    return %c0_i32, %c0_i32_0 : i32, i32
  }
  func.func @transform_5(%arg0: i32) -> (i32, i32) {
    %c0_i32 = arith.constant 0 : i32
    %c0_i32_0 = arith.constant 0 : i32
    %c0_i32_1 = arith.constant 0 : i32
    return %c0_i32, %c0_i32_0 : i32, i32
  }
  func.func @transform_6(%arg0: i32) -> (i32, i32) {
    %c0_i32 = arith.constant 0 : i32
    %c0_i32_0 = arith.constant 0 : i32
    %c0_i32_1 = arith.constant 0 : i32
    return %c0_i32, %c0_i32_0 : i32, i32
  }
  func.func @transform_7(%arg0: i32) -> i32 {
    %c0_i32 = arith.constant 0 : i32
    %c0_i32_0 = arith.constant 0 : i32
    return %c0_i32 : i32
  }
  func.func @transform_8(%arg0: i32) -> (i32, i32) {
    %c0_i32 = arith.constant 0 : i32
    %c0_i32_0 = arith.constant 0 : i32
    return %arg0, %c0_i32 : i32, i32
  }
}

</mosaic_0001>

<llo_original>
// kernel: tpu_custom_call.1
$region0: #{tpu_custom_call.1}
  #allocation0 [shape = 'u32[]', space=smem, size = 0x4, offset = 0x4, fixed_abs, tag = 'smem constant byte address 0x4 - core index']
  #allocation1 [shape = 'u32[144,128]{1,0:T(1,128)}', space=vmem, size = 0x12000, scoped, tag = 'internal scratch']
  #allocation2 [shape = 'f32[1]{0:T(128)S(6)}', space=smem, size = 0x200, scoped, tag = 'scoped memory for tpu_custom_call.1']
  %s0 = inlined_call_operand.hbm [shape: f32[8,128], index: 0, kind: input, shape index: {}]
  %s1 = inlined_call_operand.hbm [shape: f32[128,128], index: 1, kind: input, shape index: {}]
  %s2 = inlined_call_operand.vmem [shape: f32[1,128], index: 2, kind: input, shape index: {}]
  %s3 = inlined_call_operand.hbm [shape: f32[128,128], index: 3, kind: input, shape index: {}]
  %s4 = inlined_call_operand.vmem [shape: f32[1,128], index: 4, kind: input, shape index: {}]
  %s5 = inlined_call_operand.hbm [shape: f32[128,128], index: 5, kind: input, shape index: {}]
  %s6 = inlined_call_operand.vmem [shape: f32[1,128], index: 6, kind: input, shape index: {}]
  %s7 = inlined_call_operand.<no memory space> [shape: f32[1], index: 7, kind: input, shape index: {}]
  %s8 = inlined_call_operand.hbm [shape: f32[8,128], index: 8, kind: output, shape index: {}]
  %s9 = sld [smem:[#allocation0]]
  $region58: #{tpu_custom_call.1} parent=0
    _
  %s11 = ssub.s32 1, %s9
  %s12 = scalar_select 0, %s11, %s9
  %13 = sst [smem:[#allocation2]] %s7
  $region1: #{tpu_custom_call.1} parent=0
    #allocation3 [shape = 'u8[4096]{0}', space=vmem, size = 0x1000, scoped, tag = 'input window, operand 0, single buffered']
    #allocation4 [shape = 's32[1]{0}', space=sflag, size = 0x4, scoped, tag = 'scoped memory for tpu_custom_call.1']
    #allocation5 [shape = 's32[1]{0}', space=sflag, size = 0x4, scoped, tag = 'scoped memory for tpu_custom_call.1']
    #allocation6 [shape = 'u8[65536]{0}', space=vmem, size = 0x10000, scoped, tag = 'input window, operand 1, single buffered']
    #allocation7 [shape = 's32[1]{0}', space=sflag, size = 0x4, scoped, tag = 'scoped memory for tpu_custom_call.1']
    #allocation8 [shape = 'u8[65536]{0}', space=vmem, size = 0x10000, scoped, tag = 'input window, operand 3, single buffered']
    #allocation9 [shape = 'u8[65536]{0}', space=vmem, size = 0x10000, scoped, tag = 'input window, operand 5, single buffered']
    #allocation10 [shape = 's32[1]{0}', space=sflag, size = 0x4, scoped, tag = 'scoped memory for tpu_custom_call.1']
    #allocation11 [shape = 'u8[4096]{0}', space=vmem, size = 0x1000, scoped, tag = 'output window, operand 0, single buffered']
    %14 = vsyncpa [#allocation4], 0
    %15 = vsyncpa [#allocation7], 0
    %16 = vsyncpa [#allocation10], 0
    %17 = vsyncpa [#allocation5], 0
    // Predicated region
    $region2: #{tpu_custom_call.1} parent=1 // pred_check
      _
    $region3: #{tpu_custom_call.1} parent=1 // pred_check_branch
      %19 = sbr.rel (0) target = $region5
    $region4: #{tpu_custom_call.1} parent=1 // pred_region
      %s21 = ssub.s32 128, 128
      %22 = vsyncadd [#allocation4], %s21
      %s24 = sshll.u32 [#allocation3], 4
      %s25 = int_to_ptr.vmem [resolvable:$true] %s24
      %27 = dma.hbm_to_vmem [thread:$0]  %s0, 128, %s25, [#allocation4]
    $region5: #{tpu_custom_call.1} parent=1 // pred_fallthru
      _
    // Predicated region
    $region6: #{tpu_custom_call.1} parent=1 // pred_check
      _
    $region7: #{tpu_custom_call.1} parent=1 // pred_check_branch
      %29 = sbr.rel (0) target = $region9
    $region8: #{tpu_custom_call.1} parent=1 // pred_region
      %s31 = ssub.s32 2048, 2048
      %32 = vsyncadd [#allocation7], %s31
      %s33 = sshll.u32 [#allocation6], 4
      %s34 = int_to_ptr.vmem [resolvable:$true] %s33
      %39 = dma.hbm_to_vmem [thread:$0]  %s1, 2048, %s34, [#allocation7], 128, 128, 8
    $region9: #{tpu_custom_call.1} parent=1 // pred_fallthru
      _
    // Predicated region
    $region10: #{tpu_custom_call.1} parent=1 // pred_check
      _
    $region11: #{tpu_custom_call.1} parent=1 // pred_check_branch
      %41 = sbr.rel (0) target = $region13
    $region12: #{tpu_custom_call.1} parent=1 // pred_region
      _
    $region13: #{tpu_custom_call.1} parent=1 // pred_fallthru
      _
    // Predicated region
    $region14: #{tpu_custom_call.1} parent=1 // pred_check
      _
    $region15: #{tpu_custom_call.1} parent=1 // pred_check_branch
      %43 = sbr.rel (0) target = $region17
    $region16: #{tpu_custom_call.1} parent=1 // pred_region
      %s45 = ssub.s32 2048, 2048
      %46 = vsyncadd [#allocation7], %s45
      %s47 = sshll.u32 [#allocation8], 4
      %s48 = int_to_ptr.vmem [resolvable:$true] %s47
      %53 = dma.hbm_to_vmem [thread:$0]  %s3, 2048, %s48, [#allocation7], 128, 128, 8
    $region17: #{tpu_custom_call.1} parent=1 // pred_fallthru
      _
    // Predicated region
    $region18: #{tpu_custom_call.1} parent=1 // pred_check
      _
    $region19: #{tpu_custom_call.1} parent=1 // pred_check_branch
      %55 = sbr.rel (0) target = $region21
    $region20: #{tpu_custom_call.1} parent=1 // pred_region
      _
    $region21: #{tpu_custom_call.1} parent=1 // pred_fallthru
      _
    // Predicated region
    $region22: #{tpu_custom_call.1} parent=1 // pred_check
      _
    $region23: #{tpu_custom_call.1} parent=1 // pred_check_branch
      %57 = sbr.rel (0) target = $region25
    $region24: #{tpu_custom_call.1} parent=1 // pred_region
      %s59 = ssub.s32 2048, 2048
      %60 = vsyncadd [#allocation10], %s59
      %s61 = sshll.u32 [#allocation9], 4
      %s62 = int_to_ptr.vmem [resolvable:$true] %s61
      %67 = dma.hbm_to_vmem [thread:$0]  %s5, 2048, %s62, [#allocation10], 128, 128, 8
    $region25: #{tpu_custom_call.1} parent=1 // pred_fallthru
      _
    // Predicated region
    $region26: #{tpu_custom_call.1} parent=1 // pred_check
      _
    $region27: #{tpu_custom_call.1} parent=1 // pred_check_branch
      %69 = sbr.rel (0) target = $region29
    $region28: #{tpu_custom_call.1} parent=1 // pred_region
      _
    $region29: #{tpu_custom_call.1} parent=1 // pred_fallthru
      _
    // Predicated region
    $region30: #{tpu_custom_call.1} parent=1 // pred_check
      _
    $region31: #{tpu_custom_call.1} parent=1 // pred_check_branch
      %71 = sbr.rel (0) target = $region33
    $region32: #{tpu_custom_call.1} parent=1 // pred_region
      _
    $region33: #{tpu_custom_call.1} parent=1 // pred_fallthru
      _
    // Predicated region
    $region34: #{tpu_custom_call.1} parent=1 // pred_check
      _
    $region35: #{tpu_custom_call.1} parent=1 // pred_check_branch
      %73 = sbr.rel (0) target = $region37
    $region36: #{tpu_custom_call.1} parent=1 // pred_region
      %74 = dma.done [#allocation4], 128
    $region37: #{tpu_custom_call.1} parent=1 // pred_fallthru
      _
    // Predicated region
    $region38: #{tpu_custom_call.1} parent=1 // pred_check
      _
    $region39: #{tpu_custom_call.1} parent=1 // pred_check_branch
      %76 = sbr.rel (0) target = $region41
    $region40: #{tpu_custom_call.1} parent=1 // pred_region
      %77 = dma.done [#allocation7], 2048
    $region41: #{tpu_custom_call.1} parent=1 // pred_fallthru
      _
    // Predicated region
    $region42: #{tpu_custom_call.1} parent=1 // pred_check
      _
    $region43: #{tpu_custom_call.1} parent=1 // pred_check_branch
      %79 = sbr.rel (0) target = $region45
    $region44: #{tpu_custom_call.1} parent=1 // pred_region
      %80 = dma.done [#allocation7], 2048
    $region45: #{tpu_custom_call.1} parent=1 // pred_fallthru
      _
    // Predicated region
    $region46: #{tpu_custom_call.1} parent=1 // pred_check
      _
    $region47: #{tpu_custom_call.1} parent=1 // pred_check_branch
      %82 = sbr.rel (0) target = $region49
    $region48: #{tpu_custom_call.1} parent=1 // pred_region
      %83 = dma.done [#allocation10], 2048
    $region49: #{tpu_custom_call.1} parent=1 // pred_fallthru
      _
    %s84 = sld [smem:[#allocation2]]
    %v85 = vld [vmem:[#allocation3] sm:$0xff]
    %v86 = vld [vmem:[#allocation6] sm:$0xff]
    %v87 = vld [vmem:[#allocation6 + $0x8] sm:$0xff]
    %v88 = vld [vmem:[#allocation6 + $0x10] sm:$0xff]
    %v89 = vld [vmem:[#allocation6 + $0x18] sm:$0xff]
    %v90 = vld [vmem:[#allocation6 + $0x20] sm:$0xff]
    %v91 = vld [vmem:[#allocation6 + $0x28] sm:$0xff]
    %v92 = vld [vmem:[#allocation6 + $0x30] sm:$0xff]
    %v93 = vld [vmem:[#allocation6 + $0x38] sm:$0xff]
    %v94 = vld [vmem:[#allocation6 + $0x40] sm:$0xff]
    %v95 = vld [vmem:[#allocation6 + $0x48] sm:$0xff]
    %v96 = vld [vmem:[#allocation6 + $0x50] sm:$0xff]
    %v97 = vld [vmem:[#allocation6 + $0x58] sm:$0xff]
    %v98 = vld [vmem:[#allocation6 + $0x60] sm:$0xff]
    %v99 = vld [vmem:[#allocation6 + $0x68] sm:$0xff]
    %v100 = vld [vmem:[#allocation6 + $0x70] sm:$0xff]
    %v101 = vld [vmem:[#allocation6 + $0x78] sm:$0xff]
    %v102 = vld [vmem:[%s2] sm:$0x1]
    %v104 = vlaneseq
    %v105 = vshrl.u32 %v104, 7
    %v106 = vsub.s32 0, %v105
    %v107 = vrot.slane %v102, %v106
    %109 = vmatprep.subr.mxu0 0.0
    %110 = vmatpush1.msra.mxu0 %v101
    %111 = vmatprep.subr.mxu0 0.0
    %112 = vmatpush1.msra.mxu0 %v100
    %113 = vmatprep.subr.mxu0 0.0
    %114 = vmatpush1.msra.mxu0 %v99
    %115 = vmatprep.subr.mxu0 0.0
    %116 = vmatpush1.msra.mxu0 %v98
    %117 = vmatprep.subr.mxu0 0.0
    %118 = vmatpush1.msra.mxu0 %v97
    %119 = vmatprep.subr.mxu0 0.0
    %120 = vmatpush1.msra.mxu0 %v96
    %121 = vmatprep.subr.mxu0 0.0
    %122 = vmatpush1.msra.mxu0 %v95
    %123 = vmatprep.subr.mxu0 0.0
    %124 = vmatpush1.msra.mxu0 %v94
    %125 = vmatprep.subr.mxu0 0.0
    %126 = vmatpush1.msra.mxu0 %v93
    %127 = vmatprep.subr.mxu0 0.0
    %128 = vmatpush1.msra.mxu0 %v92
    %129 = vmatprep.subr.mxu0 0.0
    %130 = vmatpush1.msra.mxu0 %v91
    %131 = vmatprep.subr.mxu0 0.0
    %132 = vmatpush1.msra.mxu0 %v90
    %133 = vmatprep.subr.mxu0 0.0
    %134 = vmatpush1.msra.mxu0 %v89
    %135 = vmatprep.subr.mxu0 0.0
    %136 = vmatpush1.msra.mxu0 %v88
    %137 = vmatprep.subr.mxu0 0.0
    %138 = vmatpush1.msra.mxu0 %v87
    %139 = vmatprep.subr.mxu0 0.0
    %140 = vmatpush1.msra.mxu0 %v86
    %141 = vmatprep.subr.mxu0 0.0
    %142 = vmatpush2.msra.mxu0 0.0
    %143 = vmatprep.subr.mxu0 0.0
    %144 = vmatpush2.msra.mxu0 0.0
    %145 = vmatprep.subr.mxu0 0.0
    %146 = vmatpush2.msra.mxu0 0.0
    %147 = vmatprep.subr.mxu0 0.0
    %148 = vmatpush2.msra.mxu0 0.0
    %149 = vmatprep.subr.mxu0 0.0
    %150 = vmatpush2.msra.mxu0 0.0
    %151 = vmatprep.subr.mxu0 0.0
    %152 = vmatpush2.msra.mxu0 0.0
    %153 = vmatprep.subr.mxu0 0.0
    %154 = vmatpush2.msra.mxu0 0.0
    %155 = vmatprep.subr.mxu0 0.0
    %156 = vmatpush2.msra.mxu0 0.0
    %157 = vmatprep.subr.mxu0 0.0
    %158 = vmatpush2.msra.mxu0 0.0
    %159 = vmatprep.subr.mxu0 0.0
    %160 = vmatpush2.msra.mxu0 0.0
    %161 = vmatprep.subr.mxu0 0.0
    %162 = vmatpush2.msra.mxu0 0.0
    %163 = vmatprep.subr.mxu0 0.0
    %164 = vmatpush2.msra.mxu0 0.0
    %165 = vmatprep.subr.mxu0 0.0
    %166 = vmatpush2.msra.mxu0 0.0
    %167 = vmatprep.subr.mxu0 0.0
    %168 = vmatpush2.msra.mxu0 0.0
    %169 = vmatprep.subr.mxu0 0.0
    %170 = vmatpush2.msra.mxu0 0.0
    %171 = vmatprep.subr.mxu0 0.0
    %172 = vmatpush2.msra.mxu0 0.0
    %173 = vmatprep.mubr.f32.mxu0 0.0
    %174 = vmatmul.mubr.f32.gmra.mxu0 %v85
    %v175 = vpop.f32.mrf.mxu0
    %v176 = vadd.f32 %v107, %v175
    %v177 = vpop.f32.mrf.mxu0
    %178 = vdwg.mxu0
    %vm179 = vcmp.ge.f32.partialorder %v176, 0.0
    %v180 = vstv %s84
    %v181 = vmul.f32 %v180, %v176
    %v182 = vsel %vm179, %v176, %v181
    %v183 = vld [vmem:[#allocation8] sm:$0xff]
    %v184 = vld [vmem:[#allocation8 + $0x8] sm:$0xff]
    %v185 = vld [vmem:[#allocation8 + $0x10] sm:$0xff]
    %v186 = vld [vmem:[#allocation8 + $0x18] sm:$0xff]
    %v187 = vld [vmem:[#allocation8 + $0x20] sm:$0xff]
    %v188 = vld [vmem:[#allocation8 + $0x28] sm:$0xff]
    %v189 = vld [vmem:[#allocation8 + $0x30] sm:$0xff]
    %v190 = vld [vmem:[#allocation8 + $0x38] sm:$0xff]
    %v191 = vld [vmem:[#allocation8 + $0x40] sm:$0xff]
    %v192 = vld [vmem:[#allocation8 + $0x48] sm:$0xff]
    %v193 = vld [vmem:[#allocation8 + $0x50] sm:$0xff]
    %v194 = vld [vmem:[#allocation8 + $0x58] sm:$0xff]
    %v195 = vld [vmem:[#allocation8 + $0x60] sm:$0xff]
    %v196 = vld [vmem:[#allocation8 + $0x68] sm:$0xff]
    %v197 = vld [vmem:[#allocation8 + $0x70] sm:$0xff]
    %v198 = vld [vmem:[#allocation8 + $0x78] sm:$0xff]
    %v199 = vld [vmem:[%s4] sm:$0x1]
    %v201 = vlaneseq
    %v202 = vshrl.u32 %v201, 7
    %v203 = vsub.s32 0, %v202
    %v204 = vrot.slane %v199, %v203
    %206 = vmatprep.subr.mxu0 0.0
    %207 = vmatpush1.msra.mxu0 %v198
    %208 = vmatprep.subr.mxu0 0.0
    %209 = vmatpush1.msra.mxu0 %v197
    %210 = vmatprep.subr.mxu0 0.0
    %211 = vmatpush1.msra.mxu0 %v196
    %212 = vmatprep.subr.mxu0 0.0
    %213 = vmatpush1.msra.mxu0 %v195
    %214 = vmatprep.subr.mxu0 0.0
    %215 = vmatpush1.msra.mxu0 %v194
    %216 = vmatprep.subr.mxu0 0.0
    %217 = vmatpush1.msra.mxu0 %v193
    %218 = vmatprep.subr.mxu0 0.0
    %219 = vmatpush1.msra.mxu0 %v192
    %220 = vmatprep.subr.mxu0 0.0
    %221 = vmatpush1.msra.mxu0 %v191
    %222 = vmatprep.subr.mxu0 0.0
    %223 = vmatpush1.msra.mxu0 %v190
    %224 = vmatprep.subr.mxu0 0.0
    %225 = vmatpush1.msra.mxu0 %v189
    %226 = vmatprep.subr.mxu0 0.0
    %227 = vmatpush1.msra.mxu0 %v188
    %228 = vmatprep.subr.mxu0 0.0
    %229 = vmatpush1.msra.mxu0 %v187
    %230 = vmatprep.subr.mxu0 0.0
    %231 = vmatpush1.msra.mxu0 %v186
    %232 = vmatprep.subr.mxu0 0.0
    %233 = vmatpush1.msra.mxu0 %v185
    %234 = vmatprep.subr.mxu0 0.0
    %235 = vmatpush1.msra.mxu0 %v184
    %236 = vmatprep.subr.mxu0 0.0
    %237 = vmatpush1.msra.mxu0 %v183
    %238 = vmatprep.subr.mxu0 0.0
    %239 = vmatpush2.msra.mxu0 0.0
    %240 = vmatprep.subr.mxu0 0.0
    %241 = vmatpush2.msra.mxu0 0.0
    %242 = vmatprep.subr.mxu0 0.0
    %243 = vmatpush2.msra.mxu0 0.0
    %244 = vmatprep.subr.mxu0 0.0
    %245 = vmatpush2.msra.mxu0 0.0
    %246 = vmatprep.subr.mxu0 0.0
    %247 = vmatpush2.msra.mxu0 0.0
    %248 = vmatprep.subr.mxu0 0.0
    %249 = vmatpush2.msra.mxu0 0.0
    %250 = vmatprep.subr.mxu0 0.0
    %251 = vmatpush2.msra.mxu0 0.0
    %252 = vmatprep.subr.mxu0 0.0
    %253 = vmatpush2.msra.mxu0 0.0
    %254 = vmatprep.subr.mxu0 0.0
    %255 = vmatpush2.msra.mxu0 0.0
    %256 = vmatprep.subr.mxu0 0.0
    %257 = vmatpush2.msra.mxu0 0.0
    %258 = vmatprep.subr.mxu0 0.0
    %259 = vmatpush2.msra.mxu0 0.0
    %260 = vmatprep.subr.mxu0 0.0
    %261 = vmatpush2.msra.mxu0 0.0
    %262 = vmatprep.subr.mxu0 0.0
    %263 = vmatpush2.msra.mxu0 0.0
    %264 = vmatprep.subr.mxu0 0.0
    %265 = vmatpush2.msra.mxu0 0.0
    %266 = vmatprep.subr.mxu0 0.0
    %267 = vmatpush2.msra.mxu0 0.0
    %268 = vmatprep.subr.mxu0 0.0
    %269 = vmatpush2.msra.mxu0 0.0
    %270 = vmatprep.mubr.f32.mxu0 0.0
    %271 = vmatmul.mubr.f32.gmra.mxu0 %v182
    %v272 = vpop.f32.mrf.mxu0
    %v273 = vadd.f32 %v204, %v272
    %v274 = vpop.f32.mrf.mxu0
    %275 = vdwg.mxu0
    %vm276 = vcmp.ge.f32.partialorder %v273, 0.0
    %v277 = vmul.f32 %v180, %v273
    %v278 = vsel %vm276, %v273, %v277
    %v279 = vld [vmem:[#allocation9] sm:$0xff]
    %v280 = vld [vmem:[#allocation9 + $0x8] sm:$0xff]
    %v281 = vld [vmem:[#allocation9 + $0x10] sm:$0xff]
    %v282 = vld [vmem:[#allocation9 + $0x18] sm:$0xff]
    %v283 = vld [vmem:[#allocation9 + $0x20] sm:$0xff]
    %v284 = vld [vmem:[#allocation9 + $0x28] sm:$0xff]
    %v285 = vld [vmem:[#allocation9 + $0x30] sm:$0xff]
    %v286 = vld [vmem:[#allocation9 + $0x38] sm:$0xff]
    %v287 = vld [vmem:[#allocation9 + $0x40] sm:$0xff]
    %v288 = vld [vmem:[#allocation9 + $0x48] sm:$0xff]
    %v289 = vld [vmem:[#allocation9 + $0x50] sm:$0xff]
    %v290 = vld [vmem:[#allocation9 + $0x58] sm:$0xff]
    %v291 = vld [vmem:[#allocation9 + $0x60] sm:$0xff]
    %v292 = vld [vmem:[#allocation9 + $0x68] sm:$0xff]
    %v293 = vld [vmem:[#allocation9 + $0x70] sm:$0xff]
    %v294 = vld [vmem:[#allocation9 + $0x78] sm:$0xff]
    %v295 = vld [vmem:[%s6] sm:$0x1]
    %v297 = vlaneseq
    %v298 = vshrl.u32 %v297, 7
    %v299 = vsub.s32 0, %v298
    %v300 = vrot.slane %v295, %v299
    %302 = vmatprep.subr.mxu0 0.0
    %303 = vmatpush1.msra.mxu0 %v294
    %304 = vmatprep.subr.mxu0 0.0
    %305 = vmatpush1.msra.mxu0 %v293
    %306 = vmatprep.subr.mxu0 0.0
    %307 = vmatpush1.msra.mxu0 %v292
    %308 = vmatprep.subr.mxu0 0.0
    %309 = vmatpush1.msra.mxu0 %v291
    %310 = vmatprep.subr.mxu0 0.0
    %311 = vmatpush1.msra.mxu0 %v290
    %312 = vmatprep.subr.mxu0 0.0
    %313 = vmatpush1.msra.mxu0 %v289
    %314 = vmatprep.subr.mxu0 0.0
    %315 = vmatpush1.msra.mxu0 %v288
    %316 = vmatprep.subr.mxu0 0.0
    %317 = vmatpush1.msra.mxu0 %v287
    %318 = vmatprep.subr.mxu0 0.0
    %319 = vmatpush1.msra.mxu0 %v286
    %320 = vmatprep.subr.mxu0 0.0
    %321 = vmatpush1.msra.mxu0 %v285
    %322 = vmatprep.subr.mxu0 0.0
    %323 = vmatpush1.msra.mxu0 %v284
    %324 = vmatprep.subr.mxu0 0.0
    %325 = vmatpush1.msra.mxu0 %v283
    %326 = vmatprep.subr.mxu0 0.0
    %327 = vmatpush1.msra.mxu0 %v282
    %328 = vmatprep.subr.mxu0 0.0
    %329 = vmatpush1.msra.mxu0 %v281
    %330 = vmatprep.subr.mxu0 0.0
    %331 = vmatpush1.msra.mxu0 %v280
    %332 = vmatprep.subr.mxu0 0.0
    %333 = vmatpush1.msra.mxu0 %v279
    %334 = vmatprep.subr.mxu0 0.0
    %335 = vmatpush2.msra.mxu0 0.0
    %336 = vmatprep.subr.mxu0 0.0
    %337 = vmatpush2.msra.mxu0 0.0
    %338 = vmatprep.subr.mxu0 0.0
    %339 = vmatpush2.msra.mxu0 0.0
    %340 = vmatprep.subr.mxu0 0.0
    %341 = vmatpush2.msra.mxu0 0.0
    %342 = vmatprep.subr.mxu0 0.0
    %343 = vmatpush2.msra.mxu0 0.0
    %344 = vmatprep.subr.mxu0 0.0
    %345 = vmatpush2.msra.mxu0 0.0
    %346 = vmatprep.subr.mxu0 0.0
    %347 = vmatpush2.msra.mxu0 0.0
    %348 = vmatprep.subr.mxu0 0.0
    %349 = vmatpush2.msra.mxu0 0.0
    %350 = vmatprep.subr.mxu0 0.0
    %351 = vmatpush2.msra.mxu0 0.0
    %352 = vmatprep.subr.mxu0 0.0
    %353 = vmatpush2.msra.mxu0 0.0
    %354 = vmatprep.subr.mxu0 0.0
    %355 = vmatpush2.msra.mxu0 0.0
    %356 = vmatprep.subr.mxu0 0.0
    %357 = vmatpush2.msra.mxu0 0.0
    %358 = vmatprep.subr.mxu0 0.0
    %359 = vmatpush2.msra.mxu0 0.0
    %360 = vmatprep.subr.mxu0 0.0
    %361 = vmatpush2.msra.mxu0 0.0
    %362 = vmatprep.subr.mxu0 0.0
    %363 = vmatpush2.msra.mxu0 0.0
    %364 = vmatprep.subr.mxu0 0.0
    %365 = vmatpush2.msra.mxu0 0.0
    %366 = vmatprep.mubr.f32.mxu0 0.0
    %367 = vmatmul.mubr.f32.gmra.mxu0 %v278
    %v368 = vpop.f32.mrf.mxu0
    %v369 = vadd.f32 %v300, %v368
    %v370 = vpop.f32.mrf.mxu0
    %371 = vdwg.mxu0
    %372 = vst [vmem:[#allocation11] sm:$0xff] %v369
    // Predicated region
    $region50: #{tpu_custom_call.1} parent=1 // pred_check
      _
    $region51: #{tpu_custom_call.1} parent=1 // pred_check_branch
      %374 = sbr.rel (0) target = $region53
    $region52: #{tpu_custom_call.1} parent=1 // pred_region
      %s376 = ssub.s32 128, 128
      %377 = vsyncadd [#allocation5], %s376
      %s379 = sshll.u32 [#allocation11], 4
      %s380 = int_to_ptr.vmem [resolvable:$true] %s379
      %382 = dma.vmem_to_hbm [thread:$0]  %s380, 128, %s8, [#allocation5]
    $region53: #{tpu_custom_call.1} parent=1 // pred_fallthru
      _
    // Predicated region
    $region54: #{tpu_custom_call.1} parent=1 // pred_check
      _
    $region55: #{tpu_custom_call.1} parent=1 // pred_check_branch
      %384 = sbr.rel (0) target = $region57
    $region56: #{tpu_custom_call.1} parent=1 // pred_region
      %385 = dma.done [#allocation5], 128
    $region57: #{tpu_custom_call.1} parent=1 // pred_fallthru
      _
    %386 = vsyncpa [#allocation4], 1
    %387 = vsyncpa [#allocation7], 1
    %388 = vsyncpa [#allocation10], 1
    %389 = vsyncpa [#allocation5], 1

// kernel: tpu_custom_call.1
$region0: #{tpu_custom_call.1}
  #allocation0 [shape = 'u32[]', space=smem, size = 0x4, offset = 0x4, fixed_abs, tag = 'smem constant byte address 0x4 - core index']
  #allocation1 [shape = 'u32[144,128]{1,0:T(1,128)}', space=vmem, size = 0x12000, scoped, tag = 'internal scratch']
  #allocation2 [shape = 'f32[1]{0:T(128)S(6)}', space=smem, size = 0x200, scoped, tag = 'scoped memory for tpu_custom_call.1']
  %s0 = inlined_call_operand.hbm [shape: f32[8,128], index: 0, kind: input, shape index: {}]
  %s1 = inlined_call_operand.hbm [shape: f32[128,128], index: 1, kind: input, shape index: {}]
  %s2 = inlined_call_operand.vmem [shape: f32[1,128], index: 2, kind: input, shape index: {}]
  %s3 = inlined_call_operand.hbm [shape: f32[128,128], index: 3, kind: input, shape index: {}]
  %s4 = inlined_call_operand.vmem [shape: f32[1,128], index: 4, kind: input, shape index: {}]
  %s5 = inlined_call_operand.hbm [shape: f32[128,128], index: 5, kind: input, shape index: {}]
  %s6 = inlined_call_operand.vmem [shape: f32[1,128], index: 6, kind: input, shape index: {}]
  %s7 = inlined_call_operand.<no memory space> [shape: f32[1], index: 7, kind: input, shape index: {}]
  %s8 = inlined_call_operand.hbm [shape: f32[8,128], index: 8, kind: output, shape index: {}]
  %s9 = sld [smem:[#allocation0]]
  $region58: #{tpu_custom_call.1} parent=0
    _
  %s11 = ssub.s32 1, %s9
  %s12 = scalar_select 0, %s11, %s9
  %13 = sst [smem:[#allocation2]] %s7
  $region1: #{tpu_custom_call.1} parent=0
    #allocation3 [shape = 'u8[4096]{0}', space=vmem, size = 0x1000, scoped, tag = 'input window, operand 0, single buffered']
    #allocation4 [shape = 's32[1]{0}', space=sflag, size = 0x4, scoped, tag = 'scoped memory for tpu_custom_call.1']
    #allocation5 [shape = 's32[1]{0}', space=sflag, size = 0x4, scoped, tag = 'scoped memory for tpu_custom_call.1']
    #allocation6 [shape = 'u8[65536]{0}', space=vmem, size = 0x10000, scoped, tag = 'input window, operand 1, single buffered']
    #allocation7 [shape = 's32[1]{0}', space=sflag, size = 0x4, scoped, tag = 'scoped memory for tpu_custom_call.1']
    #allocation8 [shape = 'u8[65536]{0}', space=vmem, size = 0x10000, scoped, tag = 'input window, operand 3, single buffered']
    #allocation9 [shape = 'u8[65536]{0}', space=vmem, size = 0x10000, scoped, tag = 'input window, operand 5, single buffered']
    #allocation10 [shape = 's32[1]{0}', space=sflag, size = 0x4, scoped, tag = 'scoped memory for tpu_custom_call.1']
    #allocation11 [shape = 'u8[4096]{0}', space=vmem, size = 0x1000, scoped, tag = 'output window, operand 0, single buffered']
    %14 = vsyncpa [#allocation4], 0
    %15 = vsyncpa [#allocation7], 0
    %16 = vsyncpa [#allocation10], 0
    %17 = vsyncpa [#allocation5], 0
    // Predicated region
    $region2: #{tpu_custom_call.1} parent=1 // pred_check
      _
    $region3: #{tpu_custom_call.1} parent=1 // pred_check_branch
      %19 = sbr.rel (0) target = $region5
    $region4: #{tpu_custom_call.1} parent=1 // pred_region
      %s21 = ssub.s32 128, 128
      %22 = vsyncadd [#allocation4], %s21
      %s24 = sshll.u32 [#allocation3], 4
      %s25 = int_to_ptr.vmem [resolvable:$true] %s24
      %27 = dma.hbm_to_vmem [thread:$0]  %s0, 128, %s25, [#allocation4]
    $region5: #{tpu_custom_call.1} parent=1 // pred_fallthru
      _
    // Predicated region
    $region6: #{tpu_custom_call.1} parent=1 // pred_check
      _
    $region7: #{tpu_custom_call.1} parent=1 // pred_check_branch
      %29 = sbr.rel (0) target = $region9
    $region8: #{tpu_custom_call.1} parent=1 // pred_region
      %s31 = ssub.s32 2048, 2048
      %32 = vsyncadd [#allocation7], %s31
      %s33 = sshll.u32 [#allocation6], 4
      %s34 = int_to_ptr.vmem [resolvable:$true] %s33
      %39 = dma.hbm_to_vmem [thread:$0]  %s1, 2048, %s34, [#allocation7], 128, 128, 8
    $region9: #{tpu_custom_call.1} parent=1 // pred_fallthru
      _
    // Predicated region
    $region10: #{tpu_custom_call.1} parent=1 // pred_check
      _
    $region11: #{tpu_custom_call.1} parent=1 // pred_check_branch
      %41 = sbr.rel (0) target = $region13
    $region12: #{tpu_custom_call.1} parent=1 // pred_region
      _
    $region13: #{tpu_custom_call.1} parent=1 // pred_fallthru
      _
    // Predicated region
    $region14: #{tpu_custom_call.1} parent=1 // pred_check
      _
    $region15: #{tpu_custom_call.1} parent=1 // pred_check_branch
      %43 = sbr.rel (0) target = $region17
    $region16: #{tpu_custom_call.1} parent=1 // pred_region
      %s45 = ssub.s32 2048, 2048
      %46 = vsyncadd [#allocation7], %s45
      %s47 = sshll.u32 [#allocation8], 4
      %s48 = int_to_ptr.vmem [resolvable:$true] %s47
      %53 = dma.hbm_to_vmem [thread:$0]  %s3, 2048, %s48, [#allocation7], 128, 128, 8
    $region17: #{tpu_custom_call.1} parent=1 // pred_fallthru
      _
    // Predicated region
    $region18: #{tpu_custom_call.1} parent=1 // pred_check
      _
    $region19: #{tpu_custom_call.1} parent=1 // pred_check_branch
      %55 = sbr.rel (0) target = $region21
    $region20: #{tpu_custom_call.1} parent=1 // pred_region
      _
    $region21: #{tpu_custom_call.1} parent=1 // pred_fallthru
      _
    // Predicated region
    $region22: #{tpu_custom_call.1} parent=1 // pred_check
      _
    $region23: #{tpu_custom_call.1} parent=1 // pred_check_branch
      %57 = sbr.rel (0) target = $region25
    $region24: #{tpu_custom_call.1} parent=1 // pred_region
      %s59 = ssub.s32 2048, 2048
      %60 = vsyncadd [#allocation10], %s59
      %s61 = sshll.u32 [#allocation9], 4
      %s62 = int_to_ptr.vmem [resolvable:$true] %s61
      %67 = dma.hbm_to_vmem [thread:$0]  %s5, 2048, %s62, [#allocation10], 128, 128, 8
    $region25: #{tpu_custom_call.1} parent=1 // pred_fallthru
      _
    // Predicated region
    $region26: #{tpu_custom_call.1} parent=1 // pred_check
      _
    $region27: #{tpu_custom_call.1} parent=1 // pred_check_branch
      %69 = sbr.rel (0) target = $region29
    $region28: #{tpu_custom_call.1} parent=1 // pred_region
      _
    $region29: #{tpu_custom_call.1} parent=1 // pred_fallthru
      _
    // Predicated region
    $region30: #{tpu_custom_call.1} parent=1 // pred_check
      _
    $region31: #{tpu_custom_call.1} parent=1 // pred_check_branch
      %71 = sbr.rel (0) target = $region33
    $region32: #{tpu_custom_call.1} parent=1 // pred_region
      _
    $region33: #{tpu_custom_call.1} parent=1 // pred_fallthru
      _
    // Predicated region
    $region34: #{tpu_custom_call.1} parent=1 // pred_check
      _
    $region35: #{tpu_custom_call.1} parent=1 // pred_check_branch
      %73 = sbr.rel (0) target = $region37
    $region36: #{tpu_custom_call.1} parent=1 // pred_region
      %74 = dma.done [#allocation4], 128
    $region37: #{tpu_custom_call.1} parent=1 // pred_fallthru
      _
    // Predicated region
    $region38: #{tpu_custom_call.1} parent=1 // pred_check
      _
    $region39: #{tpu_custom_call.1} parent=1 // pred_check_branch
      %76 = sbr.rel (0) target = $region41
    $region40: #{tpu_custom_call.1} parent=1 // pred_region
      %77 = dma.done [#allocation7], 2048
    $region41: #{tpu_custom_call.1} parent=1 // pred_fallthru
      _
    // Predicated region
    $region42: #{tpu_custom_call.1} parent=1 // pred_check
      _
    $region43: #{tpu_custom_call.1} parent=1 // pred_check_branch
      %79 = sbr.rel (0) target = $region45
    $region44: #{tpu_custom_call.1} parent=1 // pred_region
      %80 = dma.done [#allocation7], 2048
    $region45: #{tpu_custom_call.1} parent=1 // pred_fallthru
      _
    // Predicated region
    $region46: #{tpu_custom_call.1} parent=1 // pred_check
      _
    $region47: #{tpu_custom_call.1} parent=1 // pred_check_branch
      %82 = sbr.rel (0) target = $region49
    $region48: #{tpu_custom_call.1} parent=1 // pred_region
      %83 = dma.done [#allocation10], 2048
    $region49: #{tpu_custom_call.1} parent=1 // pred_fallthru
      _
    %s84 = sld [smem:[#allocation2]]
    %v85 = vld [vmem:[#allocation3] sm:$0xff]
    %v86 = vld [vmem:[#allocation6] sm:$0xff]
    %v87 = vld [vmem:[#allocation6 + $0x8] sm:$0xff]
    %v88 = vld [vmem:[#allocation6 + $0x10] sm:$0xff]
    %v89 = vld [vmem:[#allocation6 + $0x18] sm:$0xff]
    %v90 = vld [vmem:[#allocation6 + $0x20] sm:$0xff]
    %v91 = vld [vmem:[#allocation6 + $0x28] sm:$0xff]
    %v92 = vld [vmem:[#allocation6 + $0x30] sm:$0xff]
    %v93 = vld [vmem:[#allocation6 + $0x38] sm:$0xff]
    %v94 = vld [vmem:[#allocation6 + $0x40] sm:$0xff]
    %v95 = vld [vmem:[#allocation6 + $0x48] sm:$0xff]
    %v96 = vld [vmem:[#allocation6 + $0x50] sm:$0xff]
    %v97 = vld [vmem:[#allocation6 + $0x58] sm:$0xff]
    %v98 = vld [vmem:[#allocation6 + $0x60] sm:$0xff]
    %v99 = vld [vmem:[#allocation6 + $0x68] sm:$0xff]
    %v100 = vld [vmem:[#allocation6 + $0x70] sm:$0xff]
    %v101 = vld [vmem:[#allocation6 + $0x78] sm:$0xff]
    %v102 = vld [vmem:[%s2] sm:$0x1]
    %v104 = vlaneseq
    %v105 = vshrl.u32 %v104, 7
    %v106 = vsub.s32 0, %v105
    %v107 = vrot.slane %v102, %v106
    %109 = vmatprep.subr.mxu0 0.0
    %110 = vmatpush1.msra.mxu0 %v101
    %111 = vmatprep.subr.mxu0 0.0
    %112 = vmatpush1.msra.mxu0 %v100
    %113 = vmatprep.subr.mxu0 0.0
    %114 = vmatpush1.msra.mxu0 %v99
    %115 = vmatprep.subr.mxu0 0.0
    %116 = vmatpush1.msra.mxu0 %v98
    %117 = vmatprep.subr.mxu0 0.0
    %118 = vmatpush1.msra.mxu0 %v97
    %119 = vmatprep.subr.mxu0 0.0
    %120 = vmatpush1.msra.mxu0 %v96
    %121 = vmatprep.subr.mxu0 0.0
    %122 = vmatpush1.msra.mxu0 %v95
    %123 = vmatprep.subr.mxu0 0.0
    %124 = vmatpush1.msra.mxu0 %v94
    %125 = vmatprep.subr.mxu0 0.0
    %126 = vmatpush1.msra.mxu0 %v93
    %127 = vmatprep.subr.mxu0 0.0
    %128 = vmatpush1.msra.mxu0 %v92
    %129 = vmatprep.subr.mxu0 0.0
    %130 = vmatpush1.msra.mxu0 %v91
    %131 = vmatprep.subr.mxu0 0.0
    %132 = vmatpush1.msra.mxu0 %v90
    %133 = vmatprep.subr.mxu0 0.0
    %134 = vmatpush1.msra.mxu0 %v89
    %135 = vmatprep.subr.mxu0 0.0
    %136 = vmatpush1.msra.mxu0 %v88
    %137 = vmatprep.subr.mxu0 0.0
    %138 = vmatpush1.msra.mxu0 %v87
    %139 = vmatprep.subr.mxu0 0.0
    %140 = vmatpush1.msra.mxu0 %v86
    %141 = vmatprep.subr.mxu0 0.0
    %142 = vmatpush2.msra.mxu0 0.0
    %143 = vmatprep.subr.mxu0 0.0
    %144 = vmatpush2.msra.mxu0 0.0
    %145 = vmatprep.subr.mxu0 0.0
    %146 = vmatpush2.msra.mxu0 0.0
    %147 = vmatprep.subr.mxu0 0.0
    %148 = vmatpush2.msra.mxu0 0.0
    %149 = vmatprep.subr.mxu0 0.0
    %150 = vmatpush2.msra.mxu0 0.0
    %151 = vmatprep.subr.mxu0 0.0
    %152 = vmatpush2.msra.mxu0 0.0
    %153 = vmatprep.subr.mxu0 0.0
    %154 = vmatpush2.msra.mxu0 0.0
    %155 = vmatprep.subr.mxu0 0.0
    %156 = vmatpush2.msra.mxu0 0.0
    %157 = vmatprep.subr.mxu0 0.0
    %158 = vmatpush2.msra.mxu0 0.0
    %159 = vmatprep.subr.mxu0 0.0
    %160 = vmatpush2.msra.mxu0 0.0
    %161 = vmatprep.subr.mxu0 0.0
    %162 = vmatpush2.msra.mxu0 0.0
    %163 = vmatprep.subr.mxu0 0.0
    %164 = vmatpush2.msra.mxu0 0.0
    %165 = vmatprep.subr.mxu0 0.0
    %166 = vmatpush2.msra.mxu0 0.0
    %167 = vmatprep.subr.mxu0 0.0
    %168 = vmatpush2.msra.mxu0 0.0
    %169 = vmatprep.subr.mxu0 0.0
    %170 = vmatpush2.msra.mxu0 0.0
    %171 = vmatprep.subr.mxu0 0.0
    %172 = vmatpush2.msra.mxu0 0.0
    %173 = vmatprep.mubr.f32.mxu0 0.0
    %174 = vmatmul.mubr.f32.gmra.mxu0 %v85
    %v175 = vpop.f32.mrf.mxu0
    %v176 = vadd.f32 %v107, %v175
    %v177 = vpop.f32.mrf.mxu0
    %178 = vdwg.mxu0
    %vm179 = vcmp.ge.f32.partialorder %v176, 0.0
    %v180 = vstv %s84
    %v181 = vmul.f32 %v180, %v176
    %v182 = vsel %vm179, %v176, %v181
    %v183 = vld [vmem:[#allocation8] sm:$0xff]
    %v184 = vld [vmem:[#allocation8 + $0x8] sm:$0xff]
    %v185 = vld [vmem:[#allocation8 + $0x10] sm:$0xff]
    %v186 = vld [vmem:[#allocation8 + $0x18] sm:$0xff]
    %v187 = vld [vmem:[#allocation8 + $0x20] sm:$0xff]
    %v188 = vld [vmem:[#allocation8 + $0x28] sm:$0xff]
    %v189 = vld [vmem:[#allocation8 + $0x30] sm:$0xff]
    %v190 = vld [vmem:[#allocation8 + $0x38] sm:$0xff]
    %v191 = vld [vmem:[#allocation8 + $0x40] sm:$0xff]
    %v192 = vld [vmem:[#allocation8 + $0x48] sm:$0xff]
    %v193 = vld [vmem:[#allocation8 + $0x50] sm:$0xff]
    %v194 = vld [vmem:[#allocation8 + $0x58] sm:$0xff]
    %v195 = vld [vmem:[#allocation8 + $0x60] sm:$0xff]
    %v196 = vld [vmem:[#allocation8 + $0x68] sm:$0xff]
    %v197 = vld [vmem:[#allocation8 + $0x70] sm:$0xff]
    %v198 = vld [vmem:[#allocation8 + $0x78] sm:$0xff]
    %v199 = vld [vmem:[%s4] sm:$0x1]
    %v201 = vlaneseq
    %v202 = vshrl.u32 %v201, 7
    %v203 = vsub.s32 0, %v202
    %v204 = vrot.slane %v199, %v203
    %206 = vmatprep.subr.mxu0 0.0
    %207 = vmatpush1.msra.mxu0 %v198
    %208 = vmatprep.subr.mxu0 0.0
    %209 = vmatpush1.msra.mxu0 %v197
    %210 = vmatprep.subr.mxu0 0.0
    %211 = vmatpush1.msra.mxu0 %v196
    %212 = vmatprep.subr.mxu0 0.0
    %213 = vmatpush1.msra.mxu0 %v195
    %214 = vmatprep.subr.mxu0 0.0
    %215 = vmatpush1.msra.mxu0 %v194
    %216 = vmatprep.subr.mxu0 0.0
    %217 = vmatpush1.msra.mxu0 %v193
    %218 = vmatprep.subr.mxu0 0.0
    %219 = vmatpush1.msra.mxu0 %v192
    %220 = vmatprep.subr.mxu0 0.0
    %221 = vmatpush1.msra.mxu0 %v191
    %222 = vmatprep.subr.mxu0 0.0
    %223 = vmatpush1.msra.mxu0 %v190
    %224 = vmatprep.subr.mxu0 0.0
    %225 = vmatpush1.msra.mxu0 %v189
    %226 = vmatprep.subr.mxu0 0.0
    %227 = vmatpush1.msra.mxu0 %v188
    %228 = vmatprep.subr.mxu0 0.0
    %229 = vmatpush1.msra.mxu0 %v187
    %230 = vmatprep.subr.mxu0 0.0
    %231 = vmatpush1.msra.mxu0 %v186
    %232 = vmatprep.subr.mxu0 0.0
    %233 = vmatpush1.msra.mxu0 %v185
    %234 = vmatprep.subr.mxu0 0.0
    %235 = vmatpush1.msra.mxu0 %v184
    %236 = vmatprep.subr.mxu0 0.0
    %237 = vmatpush1.msra.mxu0 %v183
    %238 = vmatprep.subr.mxu0 0.0
    %239 = vmatpush2.msra.mxu0 0.0
    %240 = vmatprep.subr.mxu0 0.0
    %241 = vmatpush2.msra.mxu0 0.0
    %242 = vmatprep.subr.mxu0 0.0
    %243 = vmatpush2.msra.mxu0 0.0
    %244 = vmatprep.subr.mxu0 0.0
    %245 = vmatpush2.msra.mxu0 0.0
    %246 = vmatprep.subr.mxu0 0.0
    %247 = vmatpush2.msra.mxu0 0.0
    %248 = vmatprep.subr.mxu0 0.0
    %249 = vmatpush2.msra.mxu0 0.0
    %250 = vmatprep.subr.mxu0 0.0
    %251 = vmatpush2.msra.mxu0 0.0
    %252 = vmatprep.subr.mxu0 0.0
    %253 = vmatpush2.msra.mxu0 0.0
    %254 = vmatprep.subr.mxu0 0.0
    %255 = vmatpush2.msra.mxu0 0.0
    %256 = vmatprep.subr.mxu0 0.0
    %257 = vmatpush2.msra.mxu0 0.0
    %258 = vmatprep.subr.mxu0 0.0
    %259 = vmatpush2.msra.mxu0 0.0
    %260 = vmatprep.subr.mxu0 0.0
    %261 = vmatpush2.msra.mxu0 0.0
    %262 = vmatprep.subr.mxu0 0.0
    %263 = vmatpush2.msra.mxu0 0.0
    %264 = vmatprep.subr.mxu0 0.0
    %265 = vmatpush2.msra.mxu0 0.0
    %266 = vmatprep.subr.mxu0 0.0
    %267 = vmatpush2.msra.mxu0 0.0
    %268 = vmatprep.subr.mxu0 0.0
    %269 = vmatpush2.msra.mxu0 0.0
    %270 = vmatprep.mubr.f32.mxu0 0.0
    %271 = vmatmul.mubr.f32.gmra.mxu0 %v182
    %v272 = vpop.f32.mrf.mxu0
    %v273 = vadd.f32 %v204, %v272
    %v274 = vpop.f32.mrf.mxu0
    %275 = vdwg.mxu0
    %vm276 = vcmp.ge.f32.partialorder %v273, 0.0
    %v277 = vmul.f32 %v180, %v273
    %v278 = vsel %vm276, %v273, %v277
    %v279 = vld [vmem:[#allocation9] sm:$0xff]
    %v280 = vld [vmem:[#allocation9 + $0x8] sm:$0xff]
    %v281 = vld [vmem:[#allocation9 + $0x10] sm:$0xff]
    %v282 = vld [vmem:[#allocation9 + $0x18] sm:$0xff]
    %v283 = vld [vmem:[#allocation9 + $0x20] sm:$0xff]
    %v284 = vld [vmem:[#allocation9 + $0x28] sm:$0xff]
    %v285 = vld [vmem:[#allocation9 + $0x30] sm:$0xff]
    %v286 = vld [vmem:[#allocation9 + $0x38] sm:$0xff]
    %v287 = vld [vmem:[#allocation9 + $0x40] sm:$0xff]
    %v288 = vld [vmem:[#allocation9 + $0x48] sm:$0xff]
    %v289 = vld [vmem:[#allocation9 + $0x50] sm:$0xff]
    %v290 = vld [vmem:[#allocation9 + $0x58] sm:$0xff]
    %v291 = vld [vmem:[#allocation9 + $0x60] sm:$0xff]
    %v292 = vld [vmem:[#allocation9 + $0x68] sm:$0xff]
    %v293 = vld [vmem:[#allocation9 + $0x70] sm:$0xff]
    %v294 = vld [vmem:[#allocation9 + $0x78] sm:$0xff]
    %v295 = vld [vmem:[%s6] sm:$0x1]
    %v297 = vlaneseq
    %v298 = vshrl.u32 %v297, 7
    %v299 = vsub.s32 0, %v298
    %v300 = vrot.slane %v295, %v299
    %302 = vmatprep.subr.mxu0 0.0
    %303 = vmatpush1.msra.mxu0 %v294
    %304 = vmatprep.subr.mxu0 0.0
    %305 = vmatpush1.msra.mxu0 %v293
    %306 = vmatprep.subr.mxu0 0.0
    %307 = vmatpush1.msra.mxu0 %v292
    %308 = vmatprep.subr.mxu0 0.0
    %309 = vmatpush1.msra.mxu0 %v291
    %310 = vmatprep.subr.mxu0 0.0
    %311 = vmatpush1.msra.mxu0 %v290
    %312 = vmatprep.subr.mxu0 0.0
    %313 = vmatpush1.msra.mxu0 %v289
    %314 = vmatprep.subr.mxu0 0.0
    %315 = vmatpush1.msra.mxu0 %v288
    %316 = vmatprep.subr.mxu0 0.0
    %317 = vmatpush1.msra.mxu0 %v287
    %318 = vmatprep.subr.mxu0 0.0
    %319 = vmatpush1.msra.mxu0 %v286
    %320 = vmatprep.subr.mxu0 0.0
    %321 = vmatpush1.msra.mxu0 %v285
    %322 = vmatprep.subr.mxu0 0.0
    %323 = vmatpush1.msra.mxu0 %v284
    %324 = vmatprep.subr.mxu0 0.0
    %325 = vmatpush1.msra.mxu0 %v283
    %326 = vmatprep.subr.mxu0 0.0
    %327 = vmatpush1.msra.mxu0 %v282
    %328 = vmatprep.subr.mxu0 0.0
    %329 = vmatpush1.msra.mxu0 %v281
    %330 = vmatprep.subr.mxu0 0.0
    %331 = vmatpush1.msra.mxu0 %v280
    %332 = vmatprep.subr.mxu0 0.0
    %333 = vmatpush1.msra.mxu0 %v279
    %334 = vmatprep.subr.mxu0 0.0
    %335 = vmatpush2.msra.mxu0 0.0
    %336 = vmatprep.subr.mxu0 0.0
    %337 = vmatpush2.msra.mxu0 0.0
    %338 = vmatprep.subr.mxu0 0.0
    %339 = vmatpush2.msra.mxu0 0.0
    %340 = vmatprep.subr.mxu0 0.0
    %341 = vmatpush2.msra.mxu0 0.0
    %342 = vmatprep.subr.mxu0 0.0
    %343 = vmatpush2.msra.mxu0 0.0
    %344 = vmatprep.subr.mxu0 0.0
    %345 = vmatpush2.msra.mxu0 0.0
    %346 = vmatprep.subr.mxu0 0.0
    %347 = vmatpush2.msra.mxu0 0.0
    %348 = vmatprep.subr.mxu0 0.0
    %349 = vmatpush2.msra.mxu0 0.0
    %350 = vmatprep.subr.mxu0 0.0
    %351 = vmatpush2.msra.mxu0 0.0
    %352 = vmatprep.subr.mxu0 0.0
    %353 = vmatpush2.msra.mxu0 0.0
    %354 = vmatprep.subr.mxu0 0.0
    %355 = vmatpush2.msra.mxu0 0.0
    %356 = vmatprep.subr.mxu0 0.0
    %357 = vmatpush2.msra.mxu0 0.0
    %358 = vmatprep.subr.mxu0 0.0
    %359 = vmatpush2.msra.mxu0 0.0
    %360 = vmatprep.subr.mxu0 0.0
    %361 = vmatpush2.msra.mxu0 0.0
    %362 = vmatprep.subr.mxu0 0.0
    %363 = vmatpush2.msra.mxu0 0.0
    %364 = vmatprep.subr.mxu0 0.0
    %365 = vmatpush2.msra.mxu0 0.0
    %366 = vmatprep.mubr.f32.mxu0 0.0
    %367 = vmatmul.mubr.f32.gmra.mxu0 %v278
    %v368 = vpop.f32.mrf.mxu0
    %v369 = vadd.f32 %v300, %v368
    %v370 = vpop.f32.mrf.mxu0
    %371 = vdwg.mxu0
    %372 = vst [vmem:[#allocation11] sm:$0xff] %v369
    // Predicated region
    $region50: #{tpu_custom_call.1} parent=1 // pred_check
      _
    $region51: #{tpu_custom_call.1} parent=1 // pred_check_branch
      %374 = sbr.rel (0) target = $region53
    $region52: #{tpu_custom_call.1} parent=1 // pred_region
      %s376 = ssub.s32 128, 128
      %377 = vsyncadd [#allocation5], %s376
      %s379 = sshll.u32 [#allocation11], 4
      %s380 = int_to_ptr.vmem [resolvable:$true] %s379
      %382 = dma.vmem_to_hbm [thread:$0]  %s380, 128, %s8, [#allocation5]
    $region53: #{tpu_custom_call.1} parent=1 // pred_fallthru
      _
    // Predicated region
    $region54: #{tpu_custom_call.1} parent=1 // pred_check
      _
    $region55: #{tpu_custom_call.1} parent=1 // pred_check_branch
      %384 = sbr.rel (0) target = $region57
    $region56: #{tpu_custom_call.1} parent=1 // pred_region
      %385 = dma.done [#allocation5], 128
    $region57: #{tpu_custom_call.1} parent=1 // pred_fallthru
      _
    %386 = vsyncpa [#allocation4], 1
    %387 = vsyncpa [#allocation7], 1
    %388 = vsyncpa [#allocation10], 1
    %389 = vsyncpa [#allocation5], 1

</llo_original>
